<compile_context>
chip_gen: v5e
topology: v5e:2x2
jax: 0.10.0
libtpu: 0.0.40
codegen_flags: <defaults>
</compile_context>

<pallas_src>
import functools

import jax
import jax.numpy as jnp
from jax.experimental import pallas as pl
from jax.experimental.pallas import tpu as pltpu


def _round_up(n, m):
    return ((n + m - 1) // m) * m


def mlp_kernel(x_ref, w1_ref, b1_ref, w2_ref, b2_ref, o_ref):
    # Hidden layer: bf16 x @ bf16 W1 on the MXU, f32 accumulation,
    # bias add + ReLU on the VPU in f32.
    h = jnp.dot(x_ref[...], w1_ref[...], preferred_element_type=jnp.float32)
    h = jnp.maximum(h + b1_ref[...], 0.0)
    # Output layer: cast activations to bf16 for the MXU, accumulate in f32.
    out = jnp.dot(h.astype(jnp.bfloat16), w2_ref[...],
                  preferred_element_type=jnp.float32)
    o_ref[...] = (out + b2_ref[...]).astype(o_ref.dtype)


@functools.partial(jax.jit, static_argnums=(5,))
def mlp_forward(x, w1, b1, w2, b2, out_size):
    """x: (batch, in_features) f32. w1/w2: pre-padded bf16 (in, out).
    b1/b2: pre-padded f32 (1, N).  Returns (batch, out_size) f32."""
    batch, in_features = x.shape
    k_pad, h_pad = w1.shape
    o_pad = w2.shape[1]

    # Batch tile: fill MXU rows at large batch (256), otherwise the smallest
    # multiple of 8 sublanes that covers the batch.
    tm = 256 if batch >= 256 else _round_up(max(batch, 8), 8)
    batch_pad = _round_up(batch, tm)

    # Pad activations: K -> multiple of 128, batch -> multiple of tm.
    # Streamed x is bf16 so its DMA bytes are halved along with the weights.
    x_p = jnp.zeros((batch_pad, k_pad), jnp.bfloat16)
    x_p = x_p.at[:batch, :in_features].set(x.astype(jnp.bfloat16))

    out = pl.pallas_call(
        mlp_kernel,
        out_shape=jax.ShapeDtypeStruct((batch_pad, o_pad), jnp.float32),
        grid=(batch_pad // tm,),
        in_specs=[
            pl.BlockSpec((tm, k_pad), lambda i: (i, 0)),      # x tiles stream
            pl.BlockSpec((k_pad, h_pad), lambda i: (0, 0)),   # W1 resident
            pl.BlockSpec((1, h_pad), lambda i: (0, 0)),       # b1 resident
            pl.BlockSpec((h_pad, o_pad), lambda i: (0, 0)),   # W2 resident
            pl.BlockSpec((1, o_pad), lambda i: (0, 0)),       # b2 resident
        ],
        out_specs=pl.BlockSpec((tm, o_pad), lambda i: (i, 0)),
        compiler_params=pltpu.CompilerParams(
            dimension_semantics=("parallel",)),
    )(x_p, w1, b1, w2, b2)

    # Slice back to the logical (batch, out_size) result.
    return out[:batch, :out_size]


def init_linear(key, fan_in, fan_out, k_pad, n_pad):
    """PyTorch nn.Linear-style init, zero-padded to lane-dense (k_pad, n_pad).

    Weights stored pre-transposed as (in, out) in bf16; bias as (1, n_pad) f32.
    """
    kw, kb = jax.random.split(key)
    bound = 1.0 / (fan_in ** 0.5)
    w = jax.random.uniform(kw, (fan_in, fan_out), jnp.float32, -bound, bound)
    b = jax.random.uniform(kb, (fan_out,), jnp.float32, -bound, bound)
    w_p = jnp.zeros((k_pad, n_pad), jnp.float32).at[:fan_in, :fan_out].set(w)
    b_p = jnp.zeros((1, n_pad), jnp.float32).at[0, :fan_out].set(b)
    return w_p.astype(jnp.bfloat16), b_p


if __name__ == "__main__":
    input_size, hidden, output_size = 784, 100, 10   # module defaults
    batch = 8

    K_PAD = _round_up(input_size, 128)    # 896
    H_PAD = _round_up(hidden, 128)        # 128
    O_PAD = _round_up(output_size, 128)   # 128

    key = jax.random.PRNGKey(0)
    kx, k1, k2 = jax.random.split(key, 3)

    x = jax.random.normal(kx, (batch, input_size), jnp.float32)
    w1, b1 = init_linear(k1, input_size, hidden, K_PAD, H_PAD)
    w2, b2 = init_linear(k2, hidden, output_size, H_PAD, O_PAD)

    out = mlp_forward(x, w1, b1, w2, b2, output_size)
    out = jax.block_until_ready(out)

    # Plain-JAX reference using the identical bf16-weight / f32-accumulate math.
    x_ref = jnp.zeros((batch, K_PAD), jnp.bfloat16).at[:, :input_size].set(
        x.astype(jnp.bfloat16))
    h_ref = jnp.maximum(
        jnp.dot(x_ref, w1, preferred_element_type=jnp.float32) + b1, 0.0)
    ref = (jnp.dot(h_ref.astype(jnp.bfloat16), w2,
                   preferred_element_type=jnp.float32) + b2)[:, :output_size]
    ref = jax.block_until_ready(ref)

    assert out.shape == (batch, output_size), out.shape
    max_err = float(jnp.max(jnp.abs(out - ref)))
    assert jnp.allclose(out, ref, atol=1e-3, rtol=1e-3), max_err

    print("KERNEL_OK")
</pallas_src>

<mosaic_0001>
module attributes {stable_mosaic.version = 11 : i64} {
  func.func @mlp_kernel(%arg0: i32, %arg1: memref<8x896xbf16, #tpu.memory_space<vmem>>, %arg2: memref<896x128xbf16, #tpu.memory_space<vmem>>, %arg3: memref<1x128xf32, #tpu.memory_space<vmem>>, %arg4: memref<128x128xbf16, #tpu.memory_space<vmem>>, %arg5: memref<1x128xf32, #tpu.memory_space<vmem>>, %arg6: memref<8x128xf32, #tpu.memory_space<vmem>>) attributes {dimension_semantics = [#tpu.dimension_semantics<parallel>], iteration_bounds = array<i64: 1>, scalar_prefetch = 0 : i64, scratch_operands = 0 : i64, tpu.core_type = #tpu.core_type<tc>, window_params = [{transform_indices = @transform_0, window_bounds = array<i64: 8, 896>}, {pipeline_mode = #tpu.pipeline_mode<synchronous>, transform_indices = @transform_1, window_bounds = array<i64: 896, 128>}, {pipeline_mode = #tpu.pipeline_mode<synchronous>, transform_indices = @transform_2, window_bounds = array<i64: 1, 128>}, {pipeline_mode = #tpu.pipeline_mode<synchronous>, transform_indices = @transform_3, window_bounds = array<i64: 128, 128>}, {pipeline_mode = #tpu.pipeline_mode<synchronous>, transform_indices = @transform_4, window_bounds = array<i64: 1, 128>}, {transform_indices = @transform_5, window_bounds = array<i64: 8, 128>}]} {
    %c0 = arith.constant 0 : index
    %c0_0 = arith.constant 0 : index
    %0 = vector.load %arg1[%c0, %c0_0] : memref<8x896xbf16, #tpu.memory_space<vmem>>, vector<8x896xbf16>
    %c0_1 = arith.constant 0 : index
    %c0_2 = arith.constant 0 : index
    %1 = vector.load %arg2[%c0_1, %c0_2] : memref<896x128xbf16, #tpu.memory_space<vmem>>, vector<896x128xbf16>
    %cst = arith.constant dense<0.000000e+00> : vector<8x128xf32>
    %2 = tpu.matmul %0, %1, %cst {dimension_numbers = #tpu.dot_dimension_numbers<[1], [0], [0], [1], [0, 0, 1, 1], [], []>} : vector<8x896xbf16>, vector<896x128xbf16>, vector<8x128xf32> -> vector<8x128xf32>
    %c0_3 = arith.constant 0 : index
    %c0_4 = arith.constant 0 : index
    %3 = vector.load %arg3[%c0_3, %c0_4] : memref<1x128xf32, #tpu.memory_space<vmem>>, vector<1x128xf32>
    %4 = vector.broadcast %3 : vector<1x128xf32> to vector<8x128xf32>
    %5 = arith.addf %2, %4 : vector<8x128xf32>
    %cst_5 = arith.constant 0.000000e+00 : f32
    %6 = vector.broadcast %cst_5 : f32 to vector<8x128xf32>
    %7 = arith.maximumf %5, %6 : vector<8x128xf32>
    %8 = arith.truncf %7 : vector<8x128xf32> to vector<8x128xbf16>
    %c0_6 = arith.constant 0 : index
    %c0_7 = arith.constant 0 : index
    %9 = vector.load %arg4[%c0_6, %c0_7] : memref<128x128xbf16, #tpu.memory_space<vmem>>, vector<128x128xbf16>
    %cst_8 = arith.constant dense<0.000000e+00> : vector<8x128xf32>
    %10 = tpu.matmul %8, %9, %cst_8 {dimension_numbers = #tpu.dot_dimension_numbers<[1], [0], [0], [1], [0, 0, 1, 1], [], []>} : vector<8x128xbf16>, vector<128x128xbf16>, vector<8x128xf32> -> vector<8x128xf32>
    %c0_9 = arith.constant 0 : index
    %c0_10 = arith.constant 0 : index
    %11 = vector.load %arg5[%c0_9, %c0_10] : memref<1x128xf32, #tpu.memory_space<vmem>>, vector<1x128xf32>
    %12 = vector.broadcast %11 : vector<1x128xf32> to vector<8x128xf32>
    %13 = arith.addf %10, %12 : vector<8x128xf32>
    %c0_11 = arith.constant 0 : index
    %c0_12 = arith.constant 0 : index
    %14 = vector.load %arg6[%c0_11, %c0_12] : memref<8x128xf32, #tpu.memory_space<vmem>>, vector<8x128xf32>
    tpu.vector_store %arg6[%c0_11, %c0_12], %13 {strides = array<i32>} : memref<8x128xf32, #tpu.memory_space<vmem>>, vector<8x128xf32>,
    return
  }
  func.func @transform_0(%arg0: i32) -> (i32, i32) {
    %c0_i32 = arith.constant 0 : i32
    %c0_i32_0 = arith.constant 0 : i32
    return %arg0, %c0_i32 : i32, i32
  }
  func.func @transform_1(%arg0: i32) -> (i32, i32) {
    %c0_i32 = arith.constant 0 : i32
    %c0_i32_0 = arith.constant 0 : i32
    %c0_i32_1 = arith.constant 0 : i32
    return %c0_i32, %c0_i32_0 : i32, i32
  }
  func.func @transform_2(%arg0: i32) -> (i32, i32) {
    %c0_i32 = arith.constant 0 : i32
    %c0_i32_0 = arith.constant 0 : i32
    %c0_i32_1 = arith.constant 0 : i32
    return %c0_i32, %c0_i32_0 : i32, i32
  }
  func.func @transform_3(%arg0: i32) -> (i32, i32) {
    %c0_i32 = arith.constant 0 : i32
    %c0_i32_0 = arith.constant 0 : i32
    %c0_i32_1 = arith.constant 0 : i32
    return %c0_i32, %c0_i32_0 : i32, i32
  }
  func.func @transform_4(%arg0: i32) -> (i32, i32) {
    %c0_i32 = arith.constant 0 : i32
    %c0_i32_0 = arith.constant 0 : i32
    %c0_i32_1 = arith.constant 0 : i32
    return %c0_i32, %c0_i32_0 : i32, i32
  }
  func.func @transform_5(%arg0: i32) -> (i32, i32) {
    %c0_i32 = arith.constant 0 : i32
    %c0_i32_0 = arith.constant 0 : i32
    return %arg0, %c0_i32 : i32, i32
  }
}

</mosaic_0001>

<llo_original>
// kernel: mlp_forward.1
$region0: #{mlp_forward.1}
  #allocation0 [shape = 'u32[]', space=smem, size = 0x4, offset = 0x4, fixed_abs, tag = 'smem constant byte address 0x4 - core index']
  #allocation1 [shape = 'u32[72,128]{1,0:T(1,128)}', space=vmem, size = 0x9000, scoped, tag = 'internal scratch']
  %s0 = inlined_call_operand.vmem [shape: bf16[8,896], index: 0, kind: input, shape index: {}]
  %s1 = inlined_call_operand.hbm [shape: bf16[896,128], index: 1, kind: input, shape index: {}]
  %s2 = inlined_call_operand.vmem [shape: f32[1,128], index: 2, kind: input, shape index: {}]
  %s3 = inlined_call_operand.vmem [shape: bf16[128,128], index: 3, kind: input, shape index: {}]
  %s4 = inlined_call_operand.vmem [shape: f32[1,128], index: 4, kind: input, shape index: {}]
  %s5 = inlined_call_operand.hbm [shape: f32[8,128], index: 5, kind: output, shape index: {}]
  %s6 = sld [smem:[#allocation0]]
  $region34: #{mlp_forward.1} parent=0
    _
  %s8 = ssub.s32 1, %s6
  %s9 = scalar_select 0, %s8, %s6
  $region1: #{mlp_forward.1} parent=0
    #allocation2 [shape = 'u8[229376]{0}', space=vmem, size = 0x38000, scoped, tag = 'input window, operand 1, single buffered']
    #allocation3 [shape = 's32[1]{0}', space=sflag, size = 0x4, scoped, tag = 'scoped memory for mlp_forward.1']
    #allocation4 [shape = 's32[1]{0}', space=sflag, size = 0x4, scoped, tag = 'scoped memory for mlp_forward.1']
    #allocation5 [shape = 'u8[4096]{0}', space=vmem, size = 0x1000, scoped, tag = 'output window, operand 0, single buffered']
    %10 = vsyncpa [#allocation3], 0
    %11 = vsyncpa [#allocation4], 0
    // Predicated region
    $region2: #{mlp_forward.1} parent=1 // pred_check
      _
    $region3: #{mlp_forward.1} parent=1 // pred_check_branch
      %13 = sbr.rel (0) target = $region5
    $region4: #{mlp_forward.1} parent=1 // pred_region
      _
    $region5: #{mlp_forward.1} parent=1 // pred_fallthru
      _
    // Predicated region
    $region6: #{mlp_forward.1} parent=1 // pred_check
      _
    $region7: #{mlp_forward.1} parent=1 // pred_check_branch
      %15 = sbr.rel (0) target = $region9
    $region8: #{mlp_forward.1} parent=1 // pred_region
      %17 = vsyncadd [#allocation3], 0
      %s18 = sshll.u32 %s1, 4
      %s19 = int_to_ptr.hbm [resolvable:$true] %s18
      %s20 = sshll.u32 [#allocation2], 4
      %s21 = int_to_ptr.vmem [resolvable:$true] %s20
      %26 = dma.hbm_to_vmem [thread:$0]  %s19, 7168, %s21, [#allocation3], 64, 64, 4
    $region9: #{mlp_forward.1} parent=1 // pred_fallthru
      _
    // Predicated region
    $region10: #{mlp_forward.1} parent=1 // pred_check
      _
    $region11: #{mlp_forward.1} parent=1 // pred_check_branch
      %28 = sbr.rel (0) target = $region13
    $region12: #{mlp_forward.1} parent=1 // pred_region
      _
    $region13: #{mlp_forward.1} parent=1 // pred_fallthru
      _
    // Predicated region
    $region14: #{mlp_forward.1} parent=1 // pred_check
      _
    $region15: #{mlp_forward.1} parent=1 // pred_check_branch
      %30 = sbr.rel (0) target = $region17
    $region16: #{mlp_forward.1} parent=1 // pred_region
      _
    $region17: #{mlp_forward.1} parent=1 // pred_fallthru
      _
    // Predicated region
    $region18: #{mlp_forward.1} parent=1 // pred_check
      _
    $region19: #{mlp_forward.1} parent=1 // pred_check_branch
      %32 = sbr.rel (0) target = $region21
    $region20: #{mlp_forward.1} parent=1 // pred_region
      _
    $region21: #{mlp_forward.1} parent=1 // pred_fallthru
      _
    // Predicated region
    $region22: #{mlp_forward.1} parent=1 // pred_check
      _
    $region23: #{mlp_forward.1} parent=1 // pred_check_branch
      %34 = sbr.rel (0) target = $region25
    $region24: #{mlp_forward.1} parent=1 // pred_region
      %36 = dma.done [#allocation3], 7168
    $region25: #{mlp_forward.1} parent=1 // pred_fallthru
      _
    %v37 = vld [vmem:[%s0] sm:$0xff]
    %v38 = vld [vmem:[%s0 + $0x8] sm:$0xff]
    %v39 = vld [vmem:[%s0 + $0x10] sm:$0xff]
    %v40 = vld [vmem:[%s0 + $0x18] sm:$0xf]
    %v41 = vld [vmem:[#allocation2] sm:$0xf]
    %v42 = vld [vmem:[#allocation2 + $0x4] sm:$0xf]
    %v43 = vld [vmem:[#allocation2 + $0x8] sm:$0xf]
    %v44 = vld [vmem:[#allocation2 + $0xc] sm:$0xf]
    %v45 = vld [vmem:[#allocation2 + $0x10] sm:$0xf]
    %v46 = vld [vmem:[#allocation2 + $0x14] sm:$0xf]
    %v47 = vld [vmem:[#allocation2 + $0x18] sm:$0xf]
    %v48 = vld [vmem:[#allocation2 + $0x1c] sm:$0xf]
    %v49 = vld [vmem:[#allocation2 + $0x20] sm:$0xf]
    %v50 = vld [vmem:[#allocation2 + $0x24] sm:$0xf]
    %v51 = vld [vmem:[#allocation2 + $0x28] sm:$0xf]
    %v52 = vld [vmem:[#allocation2 + $0x2c] sm:$0xf]
    %v53 = vld [vmem:[#allocation2 + $0x30] sm:$0xf]
    %v54 = vld [vmem:[#allocation2 + $0x34] sm:$0xf]
    %v55 = vld [vmem:[#allocation2 + $0x38] sm:$0xf]
    %v56 = vld [vmem:[#allocation2 + $0x3c] sm:$0xf]
    %v57 = vld [vmem:[#allocation2 + $0x40] sm:$0xf]
    %v58 = vld [vmem:[#allocation2 + $0x44] sm:$0xf]
    %v59 = vld [vmem:[#allocation2 + $0x48] sm:$0xf]
    %v60 = vld [vmem:[#allocation2 + $0x4c] sm:$0xf]
    %v61 = vld [vmem:[#allocation2 + $0x50] sm:$0xf]
    %v62 = vld [vmem:[#allocation2 + $0x54] sm:$0xf]
    %v63 = vld [vmem:[#allocation2 + $0x58] sm:$0xf]
    %v64 = vld [vmem:[#allocation2 + $0x5c] sm:$0xf]
    %v65 = vld [vmem:[#allocation2 + $0x60] sm:$0xf]
    %v66 = vld [vmem:[#allocation2 + $0x64] sm:$0xf]
    %v67 = vld [vmem:[#allocation2 + $0x68] sm:$0xf]
    %v68 = vld [vmem:[#allocation2 + $0x6c] sm:$0xf]
    %v69 = vld [vmem:[#allocation2 + $0x70] sm:$0xf]
    %v70 = vld [vmem:[#allocation2 + $0x74] sm:$0xf]
    %v71 = vld [vmem:[#allocation2 + $0x78] sm:$0xf]
    %v72 = vld [vmem:[#allocation2 + $0x7c] sm:$0xf]
    %v73 = vld [vmem:[#allocation2 + $0x80] sm:$0xf]
    %v74 = vld [vmem:[#allocation2 + $0x84] sm:$0xf]
    %v75 = vld [vmem:[#allocation2 + $0x88] sm:$0xf]
    %v76 = vld [vmem:[#allocation2 + $0x8c] sm:$0xf]
    %v77 = vld [vmem:[#allocation2 + $0x90] sm:$0xf]
    %v78 = vld [vmem:[#allocation2 + $0x94] sm:$0xf]
    %v79 = vld [vmem:[#allocation2 + $0x98] sm:$0xf]
    %v80 = vld [vmem:[#allocation2 + $0x9c] sm:$0xf]
    %v81 = vld [vmem:[#allocation2 + $0xa0] sm:$0xf]
    %v82 = vld [vmem:[#allocation2 + $0xa4] sm:$0xf]
    %v83 = vld [vmem:[#allocation2 + $0xa8] sm:$0xf]
    %v84 = vld [vmem:[#allocation2 + $0xac] sm:$0xf]
    %v85 = vld [vmem:[#allocation2 + $0xb0] sm:$0xf]
    %v86 = vld [vmem:[#allocation2 + $0xb4] sm:$0xf]
    %v87 = vld [vmem:[#allocation2 + $0xb8] sm:$0xf]
    %v88 = vld [vmem:[#allocation2 + $0xbc] sm:$0xf]
    %v89 = vld [vmem:[#allocation2 + $0xc0] sm:$0xf]
    %v90 = vld [vmem:[#allocation2 + $0xc4] sm:$0xf]
    %v91 = vld [vmem:[#allocation2 + $0xc8] sm:$0xf]
    %v92 = vld [vmem:[#allocation2 + $0xcc] sm:$0xf]
    %v93 = vld [vmem:[#allocation2 + $0xd0] sm:$0xf]
    %v94 = vld [vmem:[#allocation2 + $0xd4] sm:$0xf]
    %v95 = vld [vmem:[#allocation2 + $0xd8] sm:$0xf]
    %v96 = vld [vmem:[#allocation2 + $0xdc] sm:$0xf]
    %v97 = vld [vmem:[#allocation2 + $0xe0] sm:$0xf]
    %v98 = vld [vmem:[#allocation2 + $0xe4] sm:$0xf]
    %v99 = vld [vmem:[#allocation2 + $0xe8] sm:$0xf]
    %v100 = vld [vmem:[#allocation2 + $0xec] sm:$0xf]
    %v101 = vld [vmem:[#allocation2 + $0xf0] sm:$0xf]
    %v102 = vld [vmem:[#allocation2 + $0xf4] sm:$0xf]
    %v103 = vld [vmem:[#allocation2 + $0xf8] sm:$0xf]
    %v104 = vld [vmem:[#allocation2 + $0xfc] sm:$0xf]
    %v105 = vld [vmem:[#allocation2 + $0x100] sm:$0xf]
    %v106 = vld [vmem:[#allocation2 + $0x104] sm:$0xf]
    %v107 = vld [vmem:[#allocation2 + $0x108] sm:$0xf]
    %v108 = vld [vmem:[#allocation2 + $0x10c] sm:$0xf]
    %v109 = vld [vmem:[#allocation2 + $0x110] sm:$0xf]
    %v110 = vld [vmem:[#allocation2 + $0x114] sm:$0xf]
    %v111 = vld [vmem:[#allocation2 + $0x118] sm:$0xf]
    %v112 = vld [vmem:[#allocation2 + $0x11c] sm:$0xf]
    %v113 = vld [vmem:[#allocation2 + $0x120] sm:$0xf]
    %v114 = vld [vmem:[#allocation2 + $0x124] sm:$0xf]
    %v115 = vld [vmem:[#allocation2 + $0x128] sm:$0xf]
    %v116 = vld [vmem:[#allocation2 + $0x12c] sm:$0xf]
    %v117 = vld [vmem:[#allocation2 + $0x130] sm:$0xf]
    %v118 = vld [vmem:[#allocation2 + $0x134] sm:$0xf]
    %v119 = vld [vmem:[#allocation2 + $0x138] sm:$0xf]
    %v120 = vld [vmem:[#allocation2 + $0x13c] sm:$0xf]
    %v121 = vld [vmem:[#allocation2 + $0x140] sm:$0xf]
    %v122 = vld [vmem:[#allocation2 + $0x144] sm:$0xf]
    %v123 = vld [vmem:[#allocation2 + $0x148] sm:$0xf]
    %v124 = vld [vmem:[#allocation2 + $0x14c] sm:$0xf]
    %v125 = vld [vmem:[#allocation2 + $0x150] sm:$0xf]
    %v126 = vld [vmem:[#allocation2 + $0x154] sm:$0xf]
    %v127 = vld [vmem:[#allocation2 + $0x158] sm:$0xf]
    %v128 = vld [vmem:[#allocation2 + $0x15c] sm:$0xf]
    %v129 = vld [vmem:[#allocation2 + $0x160] sm:$0xf]
    %v130 = vld [vmem:[#allocation2 + $0x164] sm:$0xf]
    %v131 = vld [vmem:[#allocation2 + $0x168] sm:$0xf]
    %v132 = vld [vmem:[#allocation2 + $0x16c] sm:$0xf]
    %v133 = vld [vmem:[#allocation2 + $0x170] sm:$0xf]
    %v134 = vld [vmem:[#allocation2 + $0x174] sm:$0xf]
    %v135 = vld [vmem:[#allocation2 + $0x178] sm:$0xf]
    %v136 = vld [vmem:[#allocation2 + $0x17c] sm:$0xf]
    %v137 = vld [vmem:[#allocation2 + $0x180] sm:$0xf]
    %v138 = vld [vmem:[#allocation2 + $0x184] sm:$0xf]
    %v139 = vld [vmem:[#allocation2 + $0x188] sm:$0xf]
    %v140 = vld [vmem:[#allocation2 + $0x18c] sm:$0xf]
    %v141 = vld [vmem:[#allocation2 + $0x190] sm:$0xf]
    %v142 = vld [vmem:[#allocation2 + $0x194] sm:$0xf]
    %v143 = vld [vmem:[#allocation2 + $0x198] sm:$0xf]
    %v144 = vld [vmem:[#allocation2 + $0x19c] sm:$0xf]
    %v145 = vld [vmem:[#allocation2 + $0x1a0] sm:$0xf]
    %v146 = vld [vmem:[#allocation2 + $0x1a4] sm:$0xf]
    %v147 = vld [vmem:[#allocation2 + $0x1a8] sm:$0xf]
    %v148 = vld [vmem:[#allocation2 + $0x1ac] sm:$0xf]
    %v149 = vld [vmem:[#allocation2 + $0x1b0] sm:$0xf]
    %v150 = vld [vmem:[#allocation2 + $0x1b4] sm:$0xf]
    %v151 = vld [vmem:[#allocation2 + $0x1b8] sm:$0xf]
    %v152 = vld [vmem:[#allocation2 + $0x1bc] sm:$0xf]
    %v153 = vld [vmem:[%s2] sm:$0x1]
    %v155 = vperm.slane %v153, 0
    %v161 = vunpack.c.l.b16 %v37
    %v162 = vunpack.c.h.b16 %v37
    %v163 = vunpack.c.l.b16 %v38
    %v164 = vunpack.c.h.b16 %v38
    %v165 = vunpack.c.l.b16 %v39
    %v166 = vunpack.c.h.b16 %v39
    %v167 = vunpack.c.l.b16 %v40
    %v168 = vpack.c.b16 %v161, %v161
    %v169 = vpack.c.b16 %v162, %v162
    %v170 = vpack.c.b16 %v163, %v163
    %v171 = vpack.c.b16 %v164, %v164
    %v172 = vpack.c.b16 %v165, %v165
    %v173 = vpack.c.b16 %v166, %v166
    %v174 = vpack.c.b16 %v167, %v167
    %v294 = vunpack.c.l.b16 %v41
    %v295 = vunpack.c.l.b16 %v42
    %v296 = vunpack.c.l.b16 %v43
    %v297 = vunpack.c.l.b16 %v44
    %v298 = vunpack.c.l.b16 %v45
    %v299 = vunpack.c.l.b16 %v46
    %v300 = vunpack.c.l.b16 %v47
    %v301 = vunpack.c.l.b16 %v48
    %v302 = vunpack.c.l.b16 %v49
    %v303 = vunpack.c.l.b16 %v50
    %v304 = vunpack.c.l.b16 %v51
    %v305 = vunpack.c.l.b16 %v52
    %v306 = vunpack.c.l.b16 %v53
    %v307 = vunpack.c.l.b16 %v54
    %v308 = vunpack.c.l.b16 %v55
    %v309 = vunpack.c.l.b16 %v56
    %v310 = vunpack.c.l.b16 %v57
    %v311 = vunpack.c.l.b16 %v58
    %v312 = vunpack.c.l.b16 %v59
    %v313 = vunpack.c.l.b16 %v60
    %v314 = vunpack.c.l.b16 %v61
    %v315 = vunpack.c.l.b16 %v62
    %v316 = vunpack.c.l.b16 %v63
    %v317 = vunpack.c.l.b16 %v64
    %v318 = vunpack.c.l.b16 %v65
    %v319 = vunpack.c.l.b16 %v66
    %v320 = vunpack.c.l.b16 %v67
    %v321 = vunpack.c.l.b16 %v68
    %v322 = vunpack.c.l.b16 %v69
    %v323 = vunpack.c.l.b16 %v70
    %v324 = vunpack.c.l.b16 %v71
    %v325 = vunpack.c.l.b16 %v72
    %v326 = vunpack.c.l.b16 %v73
    %v327 = vunpack.c.l.b16 %v74
    %v328 = vunpack.c.l.b16 %v75
    %v329 = vunpack.c.l.b16 %v76
    %v330 = vunpack.c.l.b16 %v77
    %v331 = vunpack.c.l.b16 %v78
    %v332 = vunpack.c.l.b16 %v79
    %v333 = vunpack.c.l.b16 %v80
    %v334 = vunpack.c.l.b16 %v81
    %v335 = vunpack.c.l.b16 %v82
    %v336 = vunpack.c.l.b16 %v83
    %v337 = vunpack.c.l.b16 %v84
    %v338 = vunpack.c.l.b16 %v85
    %v339 = vunpack.c.l.b16 %v86
    %v340 = vunpack.c.l.b16 %v87
    %v341 = vunpack.c.l.b16 %v88
    %v342 = vunpack.c.l.b16 %v89
    %v343 = vunpack.c.l.b16 %v90
    %v344 = vunpack.c.l.b16 %v91
    %v345 = vunpack.c.l.b16 %v92
    %v346 = vunpack.c.l.b16 %v93
    %v347 = vunpack.c.l.b16 %v94
    %v348 = vunpack.c.l.b16 %v95
    %v349 = vunpack.c.l.b16 %v96
    %v350 = vunpack.c.l.b16 %v97
    %v351 = vunpack.c.l.b16 %v98
    %v352 = vunpack.c.l.b16 %v99
    %v353 = vunpack.c.l.b16 %v100
    %v354 = vunpack.c.l.b16 %v101
    %v355 = vunpack.c.l.b16 %v102
    %v356 = vunpack.c.l.b16 %v103
    %v357 = vunpack.c.l.b16 %v104
    %v358 = vunpack.c.l.b16 %v105
    %v359 = vunpack.c.l.b16 %v106
    %v360 = vunpack.c.l.b16 %v107
    %v361 = vunpack.c.l.b16 %v108
    %v362 = vunpack.c.l.b16 %v109
    %v363 = vunpack.c.l.b16 %v110
    %v364 = vunpack.c.l.b16 %v111
    %v365 = vunpack.c.l.b16 %v112
    %v366 = vunpack.c.l.b16 %v113
    %v367 = vunpack.c.l.b16 %v114
    %v368 = vunpack.c.l.b16 %v115
    %v369 = vunpack.c.l.b16 %v116
    %v370 = vunpack.c.l.b16 %v117
    %v371 = vunpack.c.l.b16 %v118
    %v372 = vunpack.c.l.b16 %v119
    %v373 = vunpack.c.l.b16 %v120
    %v374 = vunpack.c.l.b16 %v121
    %v375 = vunpack.c.l.b16 %v122
    %v376 = vunpack.c.l.b16 %v123
    %v377 = vunpack.c.l.b16 %v124
    %v378 = vunpack.c.l.b16 %v125
    %v379 = vunpack.c.l.b16 %v126
    %v380 = vunpack.c.l.b16 %v127
    %v381 = vunpack.c.l.b16 %v128
    %v382 = vunpack.c.l.b16 %v129
    %v383 = vunpack.c.l.b16 %v130
    %v384 = vunpack.c.l.b16 %v131
    %v385 = vunpack.c.l.b16 %v132
    %v386 = vunpack.c.l.b16 %v133
    %v387 = vunpack.c.l.b16 %v134
    %v388 = vunpack.c.l.b16 %v135
    %v389 = vunpack.c.l.b16 %v136
    %v390 = vunpack.c.l.b16 %v137
    %v391 = vunpack.c.l.b16 %v138
    %v392 = vunpack.c.l.b16 %v139
    %v393 = vunpack.c.l.b16 %v140
    %v394 = vunpack.c.l.b16 %v141
    %v395 = vunpack.c.l.b16 %v142
    %v396 = vunpack.c.l.b16 %v143
    %v397 = vunpack.c.l.b16 %v144
    %v398 = vunpack.c.l.b16 %v145
    %v399 = vunpack.c.l.b16 %v146
    %v400 = vunpack.c.l.b16 %v147
    %v401 = vunpack.c.l.b16 %v148
    %v402 = vunpack.c.l.b16 %v149
    %v403 = vunpack.c.l.b16 %v150
    %v404 = vunpack.c.l.b16 %v151
    %v405 = vunpack.c.l.b16 %v152
    %v406 = vpack.c.b16 %v295, %v294
    %v407 = vpack.c.b16 %v297, %v296
    %v408 = vpack.c.b16 %v299, %v298
    %v409 = vpack.c.b16 %v301, %v300
    %v410 = vpack.c.b16 %v303, %v302
    %v411 = vpack.c.b16 %v305, %v304
    %v412 = vpack.c.b16 %v307, %v306
    %v413 = vpack.c.b16 %v309, %v308
    %v414 = vpack.c.b16 %v311, %v310
    %v415 = vpack.c.b16 %v313, %v312
    %v416 = vpack.c.b16 %v315, %v314
    %v417 = vpack.c.b16 %v317, %v316
    %v418 = vpack.c.b16 %v319, %v318
    %v419 = vpack.c.b16 %v321, %v320
    %v420 = vpack.c.b16 %v323, %v322
    %v421 = vpack.c.b16 %v325, %v324
    %v422 = vpack.c.b16 %v327, %v326
    %v423 = vpack.c.b16 %v329, %v328
    %v424 = vpack.c.b16 %v331, %v330
    %v425 = vpack.c.b16 %v333, %v332
    %v426 = vpack.c.b16 %v335, %v334
    %v427 = vpack.c.b16 %v337, %v336
    %v428 = vpack.c.b16 %v339, %v338
    %v429 = vpack.c.b16 %v341, %v340
    %v430 = vpack.c.b16 %v343, %v342
    %v431 = vpack.c.b16 %v345, %v344
    %v432 = vpack.c.b16 %v347, %v346
    %v433 = vpack.c.b16 %v349, %v348
    %v434 = vpack.c.b16 %v351, %v350
    %v435 = vpack.c.b16 %v353, %v352
    %v436 = vpack.c.b16 %v355, %v354
    %v437 = vpack.c.b16 %v357, %v356
    %v438 = vpack.c.b16 %v359, %v358
    %v439 = vpack.c.b16 %v361, %v360
    %v440 = vpack.c.b16 %v363, %v362
    %v441 = vpack.c.b16 %v365, %v364
    %v442 = vpack.c.b16 %v367, %v366
    %v443 = vpack.c.b16 %v369, %v368
    %v444 = vpack.c.b16 %v371, %v370
    %v445 = vpack.c.b16 %v373, %v372
    %v446 = vpack.c.b16 %v375, %v374
    %v447 = vpack.c.b16 %v377, %v376
    %v448 = vpack.c.b16 %v379, %v378
    %v449 = vpack.c.b16 %v381, %v380
    %v450 = vpack.c.b16 %v383, %v382
    %v451 = vpack.c.b16 %v385, %v384
    %v452 = vpack.c.b16 %v387, %v386
    %v453 = vpack.c.b16 %v389, %v388
    %v454 = vpack.c.b16 %v391, %v390
    %v455 = vpack.c.b16 %v393, %v392
    %v456 = vpack.c.b16 %v395, %v394
    %v457 = vpack.c.b16 %v397, %v396
    %v458 = vpack.c.b16 %v399, %v398
    %v459 = vpack.c.b16 %v401, %v400
    %v460 = vpack.c.b16 %v403, %v402
    %v461 = vpack.c.b16 %v405, %v404
    %518 = vmatpush.bf16.msra.mxu0 %v413
    %519 = vmatpush.bf16.msra.mxu0 %v412
    %520 = vmatpush.bf16.msra.mxu0 %v411
    %521 = vmatpush.bf16.msra.mxu0 %v410
    %522 = vmatpush.bf16.msra.mxu0 %v409
    %523 = vmatpush.bf16.msra.mxu0 %v408
    %524 = vmatpush.bf16.msra.mxu0 %v407
    %525 = vmatpush.bf16.msra.mxu0 %v406
    %526 = vmatmul.bf16.gmra.mxu0 %v168
    %v527 = vpop.f32.mrf.mxu0
    %v528 = vadd.f32 %v155, %v527
    %v529 = vpop.f32.mrf.mxu0
    %530 = vdwg.mxu0
    %531 = vmatpush.bf16.msra.mxu0 %v421
    %532 = vmatpush.bf16.msra.mxu0 %v420
    %533 = vmatpush.bf16.msra.mxu0 %v419
    %534 = vmatpush.bf16.msra.mxu0 %v418
    %535 = vmatpush.bf16.msra.mxu0 %v417
    %536 = vmatpush.bf16.msra.mxu0 %v416
    %537 = vmatpush.bf16.msra.mxu0 %v415
    %538 = vmatpush.bf16.msra.mxu0 %v414
    %539 = vmatmul.bf16.gmra.mxu0 %v169
    %v540 = vpop.f32.mrf.mxu0
    %v541 = vadd.f32 %v528, %v540
    %v542 = vpop.f32.mrf.mxu0
    %543 = vdwg.mxu0
    %544 = vmatpush.bf16.msra.mxu0 %v429
    %545 = vmatpush.bf16.msra.mxu0 %v428
    %546 = vmatpush.bf16.msra.mxu0 %v427
    %547 = vmatpush.bf16.msra.mxu0 %v426
    %548 = vmatpush.bf16.msra.mxu0 %v425
    %549 = vmatpush.bf16.msra.mxu0 %v424
    %550 = vmatpush.bf16.msra.mxu0 %v423
    %551 = vmatpush.bf16.msra.mxu0 %v422
    %552 = vmatmul.bf16.gmra.mxu0 %v170
    %v553 = vpop.f32.mrf.mxu0
    %v554 = vadd.f32 %v541, %v553
    %v555 = vpop.f32.mrf.mxu0
    %556 = vdwg.mxu0
    %557 = vmatpush.bf16.msra.mxu0 %v437
    %558 = vmatpush.bf16.msra.mxu0 %v436
    %559 = vmatpush.bf16.msra.mxu0 %v435
    %560 = vmatpush.bf16.msra.mxu0 %v434
    %561 = vmatpush.bf16.msra.mxu0 %v433
    %562 = vmatpush.bf16.msra.mxu0 %v432
    %563 = vmatpush.bf16.msra.mxu0 %v431
    %564 = vmatpush.bf16.msra.mxu0 %v430
    %565 = vmatmul.bf16.gmra.mxu0 %v171
    %v566 = vpop.f32.mrf.mxu0
    %v567 = vadd.f32 %v554, %v566
    %v568 = vpop.f32.mrf.mxu0
    %569 = vdwg.mxu0
    %570 = vmatpush.bf16.msra.mxu0 %v445
    %571 = vmatpush.bf16.msra.mxu0 %v444
    %572 = vmatpush.bf16.msra.mxu0 %v443
    %573 = vmatpush.bf16.msra.mxu0 %v442
    %574 = vmatpush.bf16.msra.mxu0 %v441
    %575 = vmatpush.bf16.msra.mxu0 %v440
    %576 = vmatpush.bf16.msra.mxu0 %v439
    %577 = vmatpush.bf16.msra.mxu0 %v438
    %578 = vmatmul.bf16.gmra.mxu0 %v172
    %v579 = vpop.f32.mrf.mxu0
    %v580 = vadd.f32 %v567, %v579
    %v581 = vpop.f32.mrf.mxu0
    %582 = vdwg.mxu0
    %583 = vmatpush.bf16.msra.mxu0 %v453
    %584 = vmatpush.bf16.msra.mxu0 %v452
    %585 = vmatpush.bf16.msra.mxu0 %v451
    %586 = vmatpush.bf16.msra.mxu0 %v450
    %587 = vmatpush.bf16.msra.mxu0 %v449
    %588 = vmatpush.bf16.msra.mxu0 %v448
    %589 = vmatpush.bf16.msra.mxu0 %v447
    %590 = vmatpush.bf16.msra.mxu0 %v446
    %591 = vmatmul.bf16.gmra.mxu0 %v173
    %v592 = vpop.f32.mrf.mxu0
    %v593 = vadd.f32 %v580, %v592
    %v594 = vpop.f32.mrf.mxu0
    %595 = vdwg.mxu0
    %596 = vmatpush.bf16.msra.mxu0 %v461
    %597 = vmatpush.bf16.msra.mxu0 %v460
    %598 = vmatpush.bf16.msra.mxu0 %v459
    %599 = vmatpush.bf16.msra.mxu0 %v458
    %600 = vmatpush.bf16.msra.mxu0 %v457
    %601 = vmatpush.bf16.msra.mxu0 %v456
    %602 = vmatpush.bf16.msra.mxu0 %v455
    %603 = vmatpush.bf16.msra.mxu0 %v454
    %604 = vmatmul.bf16.gmra.mxu0 %v174
    %v605 = vpop.f32.mrf.mxu0
    %v606 = vadd.f32 %v593, %v605
    %v607 = vpop.f32.mrf.mxu0
    %608 = vdwg.mxu0
    %v609 = vmax.f32 %v606, 0.0
    %v610 = vpack.c.bf16 %v609, %v609
    %v611 = vld [vmem:[%s3] sm:$0xf]
    %v612 = vld [vmem:[%s3 + $0x4] sm:$0xf]
    %v613 = vld [vmem:[%s3 + $0x8] sm:$0xf]
    %v614 = vld [vmem:[%s3 + $0xc] sm:$0xf]
    %v615 = vld [vmem:[%s3 + $0x10] sm:$0xf]
    %v616 = vld [vmem:[%s3 + $0x14] sm:$0xf]
    %v617 = vld [vmem:[%s3 + $0x18] sm:$0xf]
    %v618 = vld [vmem:[%s3 + $0x1c] sm:$0xf]
    %v619 = vld [vmem:[%s3 + $0x20] sm:$0xf]
    %v620 = vld [vmem:[%s3 + $0x24] sm:$0xf]
    %v621 = vld [vmem:[%s3 + $0x28] sm:$0xf]
    %v622 = vld [vmem:[%s3 + $0x2c] sm:$0xf]
    %v623 = vld [vmem:[%s3 + $0x30] sm:$0xf]
    %v624 = vld [vmem:[%s3 + $0x34] sm:$0xf]
    %v625 = vld [vmem:[%s3 + $0x38] sm:$0xf]
    %v626 = vld [vmem:[%s3 + $0x3c] sm:$0xf]
    %v627 = vld [vmem:[%s4] sm:$0x1]
    %v629 = vperm.slane %v627, 0
    %v647 = vunpack.c.l.b16 %v611
    %v648 = vunpack.c.l.b16 %v612
    %v649 = vunpack.c.l.b16 %v613
    %v650 = vunpack.c.l.b16 %v614
    %v651 = vunpack.c.l.b16 %v615
    %v652 = vunpack.c.l.b16 %v616
    %v653 = vunpack.c.l.b16 %v617
    %v654 = vunpack.c.l.b16 %v618
    %v655 = vunpack.c.l.b16 %v619
    %v656 = vunpack.c.l.b16 %v620
    %v657 = vunpack.c.l.b16 %v621
    %v658 = vunpack.c.l.b16 %v622
    %v659 = vunpack.c.l.b16 %v623
    %v660 = vunpack.c.l.b16 %v624
    %v661 = vunpack.c.l.b16 %v625
    %v662 = vunpack.c.l.b16 %v626
    %v663 = vpack.c.b16 %v648, %v647
    %v664 = vpack.c.b16 %v650, %v649
    %v665 = vpack.c.b16 %v652, %v651
    %v666 = vpack.c.b16 %v654, %v653
    %v667 = vpack.c.b16 %v656, %v655
    %v668 = vpack.c.b16 %v658, %v657
    %v669 = vpack.c.b16 %v660, %v659
    %v670 = vpack.c.b16 %v662, %v661
    %679 = vmatpush.bf16.msra.mxu0 %v670
    %680 = vmatpush.bf16.msra.mxu0 %v669
    %681 = vmatpush.bf16.msra.mxu0 %v668
    %682 = vmatpush.bf16.msra.mxu0 %v667
    %683 = vmatpush.bf16.msra.mxu0 %v666
    %684 = vmatpush.bf16.msra.mxu0 %v665
    %685 = vmatpush.bf16.msra.mxu0 %v664
    %686 = vmatpush.bf16.msra.mxu0 %v663
    %687 = vmatmul.bf16.gmra.mxu0 %v610
    %v688 = vpop.f32.mrf.mxu0
    %v689 = vadd.f32 %v629, %v688
    %v690 = vpop.f32.mrf.mxu0
    %691 = vdwg.mxu0
    %692 = vst [vmem:[#allocation5] sm:$0xff] %v689
    // Predicated region
    $region26: #{mlp_forward.1} parent=1 // pred_check
      _
    $region27: #{mlp_forward.1} parent=1 // pred_check_branch
      %694 = sbr.rel (0) target = $region29
    $region28: #{mlp_forward.1} parent=1 // pred_region
      %696 = vsyncadd [#allocation4], 0
      %s698 = sshll.u32 [#allocation5], 4
      %s699 = int_to_ptr.vmem [resolvable:$true] %s698
      %s700 = sshll.u32 %s5, 4
      %s701 = int_to_ptr.hbm [resolvable:$true] %s700
      %703 = dma.vmem_to_hbm [thread:$0]  %s699, 128, %s701, [#allocation4]
    $region29: #{mlp_forward.1} parent=1 // pred_fallthru
      _
    // Predicated region
    $region30: #{mlp_forward.1} parent=1 // pred_check
      _
    $region31: #{mlp_forward.1} parent=1 // pred_check_branch
      %705 = sbr.rel (0) target = $region33
    $region32: #{mlp_forward.1} parent=1 // pred_region
      %707 = dma.done [#allocation4], 128
    $region33: #{mlp_forward.1} parent=1 // pred_fallthru
      _
    %708 = vsyncpa [#allocation3], 1
    %709 = vsyncpa [#allocation4], 1

</llo_original>
